<compile_context>
chip_gen: v5e
topology: v5e:2x2
jax: 0.10.0
libtpu: 0.0.40
codegen_flags: <defaults>
</compile_context>

<pallas_src>
import jax
import jax.numpy as jnp
from jax.experimental import pallas as pl
from jax.experimental.pallas import tpu as pltpu


def _msepcfg_kernel(logits_ref, ht_ref, out_ref):
    # (TB, K) tile of rule logits, upcast in VMEM (HBM read stays native dtype)
    z = logits_ref[...].astype(jnp.float32)
    m = jnp.max(z, axis=-1, keepdims=True)            # (TB, 1) XLU reduce
    z = z - m                                          # stabilized logits
    e = jnp.exp(z)                                     # EUP
    s = jnp.sum(e, axis=-1, keepdims=True)             # (TB, 1)
    sum_ez = jnp.sum(e * z, axis=-1, keepdims=True)    # (TB, 1)
    inv_s = pl.reciprocal(s, approx=False)             # exact: keeps 1e-5 tol
    entropy = jnp.log(s) - sum_ez * inv_s              # (TB, 1)
    diff = entropy - ht_ref[...].astype(jnp.float32)   # (TB, 1)
    out_ref[...] = (diff * diff).astype(out_ref.dtype)


def msepcfg(rule_logits: jax.Array, H_t: jax.Array, *, tb_max: int = 4096) -> jax.Array:
    """(Categorical(logits=rule_logits).entropy() - H_t) ** 2 per batch row."""
    B, K = rule_logits.shape

    # Batch tile: multiple of 8 (sublane), capped so one f32 tile is ~<=2 MiB
    # (fits comfortably in v7x's smaller VMEM with double-buffering).
    pad8 = ((B + 7) // 8) * 8
    TB = min(pad8, tb_max)
    pad_B = ((B + TB - 1) // TB) * TB

    if pad_B != B:
        rule_logits = jnp.pad(rule_logits, ((0, pad_B - B), (0, 0)))

    ht = jnp.broadcast_to(jnp.asarray(H_t, jnp.float32).reshape(-1, 1), (B, 1))
    if pad_B != B:
        ht = jnp.pad(ht, ((0, pad_B - B), (0, 0)))

    out = pl.pallas_call(
        _msepcfg_kernel,
        out_shape=jax.ShapeDtypeStruct((pad_B, 1), jnp.float32),
        grid_spec=pltpu.PrefetchScalarGridSpec(
            num_scalar_prefetch=0,
            grid=(pad_B // TB,),
            in_specs=[
                pl.BlockSpec((TB, K), lambda i: (i, 0)),   # logits, native dtype
                pl.BlockSpec((TB, 1), lambda i: (i, 0)),   # H_t per row
            ],
            out_specs=pl.BlockSpec((TB, 1), lambda i: (i, 0)),
        ),
        compiler_params=pltpu.CompilerParams(
            dimension_semantics=("parallel",),   # rows independent -> megacore
        ),
    )(rule_logits, ht)

    return out[:B, 0]  # (B,), matching torch entropy batch shape


def _reference(rule_logits, H_t):
    logp = jax.nn.log_softmax(rule_logits.astype(jnp.float32), axis=-1)
    ent = -jnp.sum(jnp.exp(logp) * logp, axis=-1)
    return (ent - jnp.asarray(H_t, jnp.float32).reshape(-1)) ** 2


if __name__ == "__main__":
    key = jax.random.PRNGKey(0)
    k1, k2 = jax.random.split(key)

    B, K = 8, 128  # 8 rule distributions, 128 rule categories each
    rule_logits = jax.random.normal(k1, (B, K), dtype=jnp.float32)
    H_t = jax.random.uniform(k2, (B,), dtype=jnp.float32) * 2.0  # target entropies

    out = msepcfg(rule_logits, H_t)
    jax.block_until_ready(out)

    ref = _reference(rule_logits, H_t)
    assert out.shape == (B,)
    assert jnp.allclose(out, ref, atol=1e-5, rtol=1e-5), (out, ref)

    print("KERNEL_OK")
</pallas_src>

<mosaic_0001>
module attributes {stable_mosaic.version = 11 : i64} {
  func.func @_msepcfg_kernel(%arg0: i32, %arg1: memref<8x128xf32, #tpu.memory_space<vmem>>, %arg2: memref<8x1xf32, #tpu.memory_space<vmem>>, %arg3: memref<8x1xf32, #tpu.memory_space<vmem>>) attributes {dimension_semantics = [#tpu.dimension_semantics<parallel>], iteration_bounds = array<i64: 1>, scalar_prefetch = 0 : i64, scratch_operands = 0 : i64, tpu.core_type = #tpu.core_type<tc>, window_params = [{transform_indices = @transform_0, window_bounds = array<i64: 8, 128>}, {transform_indices = @transform_1, window_bounds = array<i64: 8, 1>}, {transform_indices = @transform_2, window_bounds = array<i64: 8, 1>}]} {
    %c0 = arith.constant 0 : index
    %c0_0 = arith.constant 0 : index
    %0 = vector.load %arg1[%c0, %c0_0] : memref<8x128xf32, #tpu.memory_space<vmem>>, vector<8x128xf32>
    %cst = arith.constant dense<0xFF800000> : vector<8xf32>
    %1 = vector.multi_reduction <maximumf>, %0, %cst [1] : vector<8x128xf32> to vector<8xf32>
    %2 = vector.shape_cast %1 : vector<8xf32> to vector<8x1xf32>
    %3 = vector.broadcast %2 : vector<8x1xf32> to vector<8x128xf32>
    %4 = arith.subf %0, %3 : vector<8x128xf32>
    %5 = math.exp %4 : vector<8x128xf32>
    %cst_1 = arith.constant dense<0.000000e+00> : vector<8xf32>
    %6 = vector.multi_reduction <add>, %5, %cst_1 [1] : vector<8x128xf32> to vector<8xf32>
    %7 = vector.shape_cast %6 : vector<8xf32> to vector<8x1xf32>
    %8 = arith.mulf %5, %4 : vector<8x128xf32>
    %cst_2 = arith.constant dense<0.000000e+00> : vector<8xf32>
    %9 = vector.multi_reduction <add>, %8, %cst_2 [1] : vector<8x128xf32> to vector<8xf32>
    %10 = vector.shape_cast %9 : vector<8xf32> to vector<8x1xf32>
    %11 = tpu.reciprocal %7 : vector<8x1xf32> -> vector<8x1xf32>
    %12 = math.log %7 : vector<8x1xf32>
    %13 = arith.mulf %10, %11 : vector<8x1xf32>
    %14 = arith.subf %12, %13 : vector<8x1xf32>
    %c0_3 = arith.constant 0 : index
    %c0_4 = arith.constant 0 : index
    %15 = vector.load %arg2[%c0_3, %c0_4] : memref<8x1xf32, #tpu.memory_space<vmem>>, vector<8x1xf32>
    %16 = arith.subf %14, %15 : vector<8x1xf32>
    %17 = arith.mulf %16, %16 : vector<8x1xf32>
    %c0_5 = arith.constant 0 : index
    %c0_6 = arith.constant 0 : index
    %18 = vector.load %arg3[%c0_5, %c0_6] : memref<8x1xf32, #tpu.memory_space<vmem>>, vector<8x1xf32>
    tpu.vector_store %arg3[%c0_5, %c0_6], %17 {strides = array<i32>} : memref<8x1xf32, #tpu.memory_space<vmem>>, vector<8x1xf32>,
    return
  }
  func.func @transform_0(%arg0: i32) -> (i32, i32) {
    %c0_i32 = arith.constant 0 : i32
    %c0_i32_0 = arith.constant 0 : i32
    return %arg0, %c0_i32 : i32, i32
  }
  func.func @transform_1(%arg0: i32) -> (i32, i32) {
    %c0_i32 = arith.constant 0 : i32
    %c0_i32_0 = arith.constant 0 : i32
    return %arg0, %c0_i32 : i32, i32
  }
  func.func @transform_2(%arg0: i32) -> (i32, i32) {
    %c0_i32 = arith.constant 0 : i32
    %c0_i32_0 = arith.constant 0 : i32
    return %arg0, %c0_i32 : i32, i32
  }
}

</mosaic_0001>

<llo_original>
// kernel: tpu_custom_call.1
$region0: #{tpu_custom_call.1}
  #allocation0 [shape = 'u32[]', space=smem, size = 0x4, offset = 0x4, fixed_abs, tag = 'smem constant byte address 0x4 - core index']
  #allocation1 [shape = 'u32[72,128]{1,0:T(1,128)}', space=vmem, size = 0x9000, scoped, tag = 'internal scratch']
  %s0 = inlined_call_operand.vmem [shape: f32[8,128], index: 0, kind: input, shape index: {}]
  %s1 = inlined_call_operand.vmem [shape: f32[8,1], index: 1, kind: input, shape index: {}]
  %s2 = inlined_call_operand.vmem [shape: f32[8,1], index: 2, kind: output, shape index: {}]
  %s3 = sld [smem:[#allocation0]]
  $region18: #{tpu_custom_call.1} parent=0
    _
  %s5 = ssub.s32 1, %s3
  %s6 = scalar_select 0, %s5, %s3
  // Predicated region
  $region2: #{tpu_custom_call.1} parent=0 // pred_check
    _
  $region3: #{tpu_custom_call.1} parent=0 // pred_check_branch
    %8 = sbr.rel (0) target = $region5
  $region4: #{tpu_custom_call.1} parent=0 // pred_region
    _
  $region5: #{tpu_custom_call.1} parent=0 // pred_fallthru
    _
  // Predicated region
  $region6: #{tpu_custom_call.1} parent=0 // pred_check
    _
  $region7: #{tpu_custom_call.1} parent=0 // pred_check_branch
    %10 = sbr.rel (0) target = $region9
  $region8: #{tpu_custom_call.1} parent=0 // pred_region
    _
  $region9: #{tpu_custom_call.1} parent=0 // pred_fallthru
    _
  %v11 = vld [vmem:[%s0] sm:$0xff]
  %12 = vmax.xlane.f32.xlu0 %v11
  %v13 = vpop.xlane.xlu0 %12
  %v14 = vsub.f32 %v11, %v13
  %v15 = vmul.f32 %v14, 1.442695
  %v16 = vpow.pop %v15
  %17 = vadd.xlane.f32.xlu0 %v16
  %v18 = vpop.xlane.xlu0 %17
  %v19 = vmul.f32 %v16, %v14
  %20 = vadd.xlane.f32.xlu0 %v19
  %v21 = vpop.xlane.xlu0 %20
  %v22 = vrcp.pop %v18
  %v23 = vmul.f32 %v18, %v22
  %v24 = vsub.f32 1.0, %v23
  %v25 = vmul.f32 %v22, %v24
  %v26 = vadd.f32 %v22, %v25
  %vm27 = vweird.f32 %v18
  %vm28 = vweird.f32 %v22
  %vm29 = vmor %vm27, %vm28
  %v30 = vsel %vm29, %v22, %v26
  %v31 = vand.u32 2147483647, %v18
  %vm32 = vcmp.eq.f32.partialorder %v31, 8.507059e+37
  %v33 = vand.u32 %v18, 2147483648
  %v34 = vor.u32 1.1754944e-38, %v33
  %v35 = vsel %vm32, %v34, %v30
  %v36 = vlog2.pop %v18
  %v37 = vmul.f32 %v36, 0.6931472
  %v38 = vmul.f32 %v21, %v35
  %v39 = vsub.f32 %v37, %v38
  %v40 = vld [vmem:[%s1] sm:$0xff]
  %v41 = vsub.f32 %v39, %v40
  %v42 = vmul.f32 %v41, %v41
  %vm43 = vcmask 7168
  %44 = vst.msk [vmem:[%s2] sm:$0xff] %vm43, %v42
  // Predicated region
  $region10: #{tpu_custom_call.1} parent=0 // pred_check
    _
  $region11: #{tpu_custom_call.1} parent=0 // pred_check_branch
    %46 = sbr.rel (0) target = $region13
  $region12: #{tpu_custom_call.1} parent=0 // pred_region
    _
  $region13: #{tpu_custom_call.1} parent=0 // pred_fallthru
    _
  // Predicated region
  $region14: #{tpu_custom_call.1} parent=0 // pred_check
    _
  $region15: #{tpu_custom_call.1} parent=0 // pred_check_branch
    %48 = sbr.rel (0) target = $region17
  $region16: #{tpu_custom_call.1} parent=0 // pred_region
    _
  $region17: #{tpu_custom_call.1} parent=0 // pred_fallthru
    _

</llo_original>
